<compile_context>
chip_gen: v5e
topology: v5e:2x2
jax: 0.10.0
libtpu: 0.0.40
codegen_flags: <defaults>
</compile_context>

<pallas_src>
import jax
import jax.numpy as jnp
from jax.experimental import pallas as pl
from jax.experimental.pallas import tpu as pltpu


def _round_up(x, m):
    return ((x + m - 1) // m) * m


def _ranker_head_kernel(x_ref, wd_ref, bd_ref, wh_ref, bh_ref, out_ref):
    """One batch tile: dense + bias + tanh + fused (sp | ct) head + bias."""
    # Activation tile is DMA'd in its native dtype; cast to the matmul dtype
    # on the VPU here (kills the wrapper-side pad/cast HBM round trip).
    x = x_ref[...].astype(wd_ref.dtype)                              # (TB, H)
    h = jnp.dot(x, wd_ref[...], preferred_element_type=jnp.float32)
    h = jnp.tanh(h + bd_ref[...])                                    # (TB, H) f32
    h = h.astype(wh_ref.dtype)                                       # bf16 for MXU
    y = jnp.dot(h, wh_ref[...], preferred_element_type=jnp.float32)
    out_ref[...] = (y + bh_ref[...]).astype(out_ref.dtype)           # (TB, Lp)


def prepare_ranker_head_params(params, *, matmul_dtype=jnp.bfloat16):
    """One-time weight prep (call at load time, NOT per forward pass):
    transpose to (in, out), fuse the sp|ct heads into one (H, Lp) weight,
    cast to the matmul dtype, and zero-pad the head width to a lane-dense
    multiple of 128 (unmasked vst).  The hidden dim is NOT padded: weight
    blocks use full array dims, so the (8,128) BlockSpec rule holds for any H
    (typical ranker hidden sizes are multiples of 128 anyway)."""
    H = params["dense_w"].shape[0]
    L = params["sp_w"].shape[0]
    Lp = _round_up(max(2 * L, 128), 128)

    wd = params["dense_w"].T.astype(matmul_dtype)                    # (H, H)
    bd = params["dense_b"].astype(jnp.float32).reshape(1, H)

    wh = jnp.zeros((H, Lp), matmul_dtype)
    wh = wh.at[:, :L].set(params["sp_w"].T.astype(matmul_dtype))
    wh = wh.at[:, L:2 * L].set(params["ct_w"].T.astype(matmul_dtype))
    bh = jnp.zeros((1, Lp), jnp.float32)
    bh = bh.at[0, :L].set(params["sp_b"].astype(jnp.float32))
    bh = bh.at[0, L:2 * L].set(params["ct_b"].astype(jnp.float32))

    return {"wd": wd, "bd": bd, "wh": wh, "bh": bh,
            "H": H, "L": L, "Lp": Lp, "matmul_dtype": matmul_dtype}


def ranker_mlp_classification_head(features, prepared, *, block_b=512,
                                   core_parallel=False, logits_dtype=None):
    """features: (B, H) in its native dtype (no pre-padding / pre-casting).
    prepared: output of prepare_ranker_head_params.  Returns (sp, ct)."""
    B, H = features.shape
    assert H == prepared["H"], "hidden size mismatch"
    L, Lp = prepared["L"], prepared["Lp"]
    mdt = prepared["matmul_dtype"]
    mdt_bytes = jnp.dtype(mdt).itemsize
    in_bytes = jnp.dtype(features.dtype).itemsize
    out_dtype = features.dtype if logits_dtype is None else logits_dtype
    out_bytes = jnp.dtype(out_dtype).itemsize

    # Batch tile: multiple of the sublane pack for the input dtype
    # (8 rows for f32, 16 for bf16), capped by block_b.
    sub = max(8, 32 // in_bytes)
    TB = min(_round_up(block_b, sub), _round_up(B, sub))
    if core_parallel:
        # v7x: keep >= 2 grid steps so both TensorCores get work.
        TB = max(sub, min(TB, _round_up(pl.cdiv(B, 2), sub)))
    # Ragged last tile (B % TB != 0) is handled by Pallas OOB masking; rows
    # are independent so padded-row garbage never contaminates valid rows.
    grid = (pl.cdiv(B, TB),)

    flops = 2 * B * H * (H + Lp)
    bytes_accessed = (B * H * in_bytes            # activations (read once)
                      + H * H * mdt_bytes         # dense weight
                      + H * Lp * mdt_bytes        # fused head weight
                      + (H + Lp) * 4              # biases
                      + B * Lp * out_bytes)       # output

    # VMEM budget: double-buffered resident weights + double-buffered
    # activation/output tiles + the f32 intermediate.
    vmem_est = (2 * (H * H + H * Lp) * mdt_bytes
                + 2 * (H + Lp) * 4
                + 2 * TB * H * in_bytes
                + 2 * TB * Lp * out_bytes
                + 2 * TB * H * 4)
    try:
        vmem_cap = getattr(pltpu.get_tpu_info(), "vmem_capacity_bytes",
                           64 * 2 ** 20)
    except Exception:  # conservative fallback if HW query is unavailable
        vmem_cap = 64 * 2 ** 20
    vmem_ceiling = (int(vmem_cap) * 7) // 8       # leave compiler headroom
    vmem_limit = int(min(max(2 * vmem_est, 16 * 2 ** 20), vmem_ceiling))

    batch_sem = pltpu.CORE_PARALLEL if core_parallel else "parallel"

    out = pl.pallas_call(
        _ranker_head_kernel,
        out_shape=jax.ShapeDtypeStruct((B, Lp), out_dtype),
        grid_spec=pltpu.PrefetchScalarGridSpec(
            num_scalar_prefetch=0,
            grid=grid,
            in_specs=[
                pl.BlockSpec((TB, H), lambda i: (i, 0)),   # activations (tiled)
                pl.BlockSpec((H, H), lambda i: (0, 0)),    # dense weight (resident)
                pl.BlockSpec((1, H), lambda i: (0, 0)),    # dense bias
                pl.BlockSpec((H, Lp), lambda i: (0, 0)),   # fused head weight
                pl.BlockSpec((1, Lp), lambda i: (0, 0)),   # fused head bias
            ],
            out_specs=pl.BlockSpec((TB, Lp), lambda i: (i, 0)),
        ),
        compiler_params=pltpu.CompilerParams(
            dimension_semantics=(batch_sem,),
            vmem_limit_bytes=vmem_limit,
        ),
        cost_estimate=pl.CostEstimate(
            flops=flops,
            transcendentals=B * H,
            bytes_accessed=bytes_accessed,
        ),
    )(features, prepared["wd"], prepared["bd"], prepared["wh"], prepared["bh"])

    logits = out[:, :2 * L]          # single narrow slice, then split columns
    return logits[:, :L], logits[:, L:]


def _init_params(key, hidden_size, num_labels, dtype=jnp.float32):
    """Deterministic synthetic init (PyTorch Linear convention: W is (out, in))."""
    ks = jax.random.split(key, 6)
    s = 1.0 / jnp.sqrt(hidden_size)
    return {
        "dense_w": jax.random.uniform(ks[0], (hidden_size, hidden_size), dtype, -s, s),
        "dense_b": jax.random.uniform(ks[1], (hidden_size,), dtype, -s, s),
        "sp_w":    jax.random.uniform(ks[2], (num_labels, hidden_size), dtype, -s, s),
        "sp_b":    jax.random.uniform(ks[3], (num_labels,), dtype, -s, s),
        "ct_w":    jax.random.uniform(ks[4], (num_labels, hidden_size), dtype, -s, s),
        "ct_b":    jax.random.uniform(ks[5], (num_labels,), dtype, -s, s),
    }


if __name__ == "__main__":
    B, H, L = 8, 128, 2          # batch, hidden_size, num_labels
    key = jax.random.PRNGKey(0)
    k_feat, k_param = jax.random.split(key)

    features = jax.random.normal(k_feat, (B, H), dtype=jnp.float32)
    params = _init_params(k_param, H, L)

    prepared = prepare_ranker_head_params(params)      # one-time weight prep

    # Whole forward under a single jit so the (tiny) post-slice ops fuse with
    # the pallas_call instead of being dispatched eagerly.
    fwd = jax.jit(lambda f: ranker_mlp_classification_head(f, prepared))
    sp, ct = fwd(features)
    jax.block_until_ready((sp, ct))

    assert sp.shape == (B, L) and ct.shape == (B, L)

    # Pure-JAX f32 reference (dropout = identity in eval). Looser tolerance
    # because the kernel runs the matmuls with bf16 inputs (f32 accumulation).
    h_ref = jnp.tanh(features @ params["dense_w"].T + params["dense_b"])
    sp_ref = h_ref @ params["sp_w"].T + params["sp_b"]
    ct_ref = h_ref @ params["ct_w"].T + params["ct_b"]
    assert jnp.allclose(sp, sp_ref, atol=3e-2, rtol=3e-2), "sp mismatch"
    assert jnp.allclose(ct, ct_ref, atol=3e-2, rtol=3e-2), "ct mismatch"

    print("KERNEL_OK")
</pallas_src>

<mosaic_0001>
module attributes {stable_mosaic.version = 11 : i64} {
  func.func @_ranker_head_kernel(%arg0: i32, %arg1: memref<8x128xf32, #tpu.memory_space<vmem>>, %arg2: memref<128x128xbf16, #tpu.memory_space<vmem>>, %arg3: memref<1x128xf32, #tpu.memory_space<vmem>>, %arg4: memref<128x128xbf16, #tpu.memory_space<vmem>>, %arg5: memref<1x128xf32, #tpu.memory_space<vmem>>, %arg6: memref<8x128xf32, #tpu.memory_space<vmem>>) attributes {dimension_semantics = [#tpu.dimension_semantics<parallel>], iteration_bounds = array<i64: 1>, scalar_prefetch = 0 : i64, scratch_operands = 0 : i64, tpu.core_type = #tpu.core_type<tc>, window_params = [{transform_indices = @transform_0, window_bounds = array<i64: 8, 128>}, {pipeline_mode = #tpu.pipeline_mode<synchronous>, transform_indices = @transform_1, window_bounds = array<i64: 128, 128>}, {pipeline_mode = #tpu.pipeline_mode<synchronous>, transform_indices = @transform_2, window_bounds = array<i64: 1, 128>}, {pipeline_mode = #tpu.pipeline_mode<synchronous>, transform_indices = @transform_3, window_bounds = array<i64: 128, 128>}, {pipeline_mode = #tpu.pipeline_mode<synchronous>, transform_indices = @transform_4, window_bounds = array<i64: 1, 128>}, {transform_indices = @transform_5, window_bounds = array<i64: 8, 128>}]} {
    %c0 = arith.constant 0 : index
    %c0_0 = arith.constant 0 : index
    %0 = vector.load %arg1[%c0, %c0_0] : memref<8x128xf32, #tpu.memory_space<vmem>>, vector<8x128xf32>
    %1 = arith.truncf %0 : vector<8x128xf32> to vector<8x128xbf16>
    %c0_1 = arith.constant 0 : index
    %c0_2 = arith.constant 0 : index
    %2 = vector.load %arg2[%c0_1, %c0_2] : memref<128x128xbf16, #tpu.memory_space<vmem>>, vector<128x128xbf16>
    %cst = arith.constant dense<0.000000e+00> : vector<8x128xf32>
    %3 = tpu.matmul %1, %2, %cst {dimension_numbers = #tpu.dot_dimension_numbers<[1], [0], [0], [1], [0, 0, 1, 1], [], []>} : vector<8x128xbf16>, vector<128x128xbf16>, vector<8x128xf32> -> vector<8x128xf32>
    %c0_3 = arith.constant 0 : index
    %c0_4 = arith.constant 0 : index
    %4 = vector.load %arg3[%c0_3, %c0_4] : memref<1x128xf32, #tpu.memory_space<vmem>>, vector<1x128xf32>
    %5 = vector.broadcast %4 : vector<1x128xf32> to vector<8x128xf32>
    %6 = arith.addf %3, %5 : vector<8x128xf32>
    %7 = math.tanh %6 : vector<8x128xf32>
    %8 = arith.truncf %7 : vector<8x128xf32> to vector<8x128xbf16>
    %c0_5 = arith.constant 0 : index
    %c0_6 = arith.constant 0 : index
    %9 = vector.load %arg4[%c0_5, %c0_6] : memref<128x128xbf16, #tpu.memory_space<vmem>>, vector<128x128xbf16>
    %cst_7 = arith.constant dense<0.000000e+00> : vector<8x128xf32>
    %10 = tpu.matmul %8, %9, %cst_7 {dimension_numbers = #tpu.dot_dimension_numbers<[1], [0], [0], [1], [0, 0, 1, 1], [], []>} : vector<8x128xbf16>, vector<128x128xbf16>, vector<8x128xf32> -> vector<8x128xf32>
    %c0_8 = arith.constant 0 : index
    %c0_9 = arith.constant 0 : index
    %11 = vector.load %arg5[%c0_8, %c0_9] : memref<1x128xf32, #tpu.memory_space<vmem>>, vector<1x128xf32>
    %12 = vector.broadcast %11 : vector<1x128xf32> to vector<8x128xf32>
    %13 = arith.addf %10, %12 : vector<8x128xf32>
    %c0_10 = arith.constant 0 : index
    %c0_11 = arith.constant 0 : index
    %14 = vector.load %arg6[%c0_10, %c0_11] : memref<8x128xf32, #tpu.memory_space<vmem>>, vector<8x128xf32>
    tpu.vector_store %arg6[%c0_10, %c0_11], %13 {strides = array<i32>} : memref<8x128xf32, #tpu.memory_space<vmem>>, vector<8x128xf32>,
    return
  }
  func.func @transform_0(%arg0: i32) -> (i32, i32) {
    %c0_i32 = arith.constant 0 : i32
    %c0_i32_0 = arith.constant 0 : i32
    return %arg0, %c0_i32 : i32, i32
  }
  func.func @transform_1(%arg0: i32) -> (i32, i32) {
    %c0_i32 = arith.constant 0 : i32
    %c0_i32_0 = arith.constant 0 : i32
    %c0_i32_1 = arith.constant 0 : i32
    return %c0_i32, %c0_i32_0 : i32, i32
  }
  func.func @transform_2(%arg0: i32) -> (i32, i32) {
    %c0_i32 = arith.constant 0 : i32
    %c0_i32_0 = arith.constant 0 : i32
    %c0_i32_1 = arith.constant 0 : i32
    return %c0_i32, %c0_i32_0 : i32, i32
  }
  func.func @transform_3(%arg0: i32) -> (i32, i32) {
    %c0_i32 = arith.constant 0 : i32
    %c0_i32_0 = arith.constant 0 : i32
    %c0_i32_1 = arith.constant 0 : i32
    return %c0_i32, %c0_i32_0 : i32, i32
  }
  func.func @transform_4(%arg0: i32) -> (i32, i32) {
    %c0_i32 = arith.constant 0 : i32
    %c0_i32_0 = arith.constant 0 : i32
    %c0_i32_1 = arith.constant 0 : i32
    return %c0_i32, %c0_i32_0 : i32, i32
  }
  func.func @transform_5(%arg0: i32) -> (i32, i32) {
    %c0_i32 = arith.constant 0 : i32
    %c0_i32_0 = arith.constant 0 : i32
    return %arg0, %c0_i32 : i32, i32
  }
}

</mosaic_0001>

<llo_original>
// kernel: _lambda_.1
$region0: #{_lambda_.1}
  #allocation0 [shape = 'u32[]', space=smem, size = 0x4, offset = 0x4, fixed_abs, tag = 'smem constant byte address 0x4 - core index']
  #allocation1 [shape = 'u32[72,128]{1,0:T(1,128)}', space=vmem, size = 0x9000, scoped, tag = 'internal scratch']
  %s0 = inlined_call_operand.hbm [shape: f32[8,128], index: 0, kind: input, shape index: {}]
  %s1 = inlined_call_operand.hbm [shape: bf16[128,128], index: 1, kind: input, shape index: {}]
  %s2 = inlined_call_operand.hbm [shape: f32[1,128], index: 2, kind: input, shape index: {}]
  %s3 = inlined_call_operand.hbm [shape: bf16[128,128], index: 3, kind: input, shape index: {}]
  %s4 = inlined_call_operand.vmem [shape: f32[1,128], index: 4, kind: input, shape index: {}]
  %s5 = inlined_call_operand.vmem [shape: f32[8,128], index: 5, kind: output, shape index: {}]
  %s6 = sld [smem:[#allocation0]]
  $region46: #{_lambda_.1} parent=0
    _
  %s8 = ssub.s32 1, %s6
  %s9 = scalar_select 0, %s8, %s6
  $region1: #{_lambda_.1} parent=0
    #allocation2 [shape = 'u8[4096]{0}', space=vmem, size = 0x1000, scoped, tag = 'input window, operand 0, single buffered']
    #allocation3 [shape = 's32[1]{0}', space=sflag, size = 0x4, scoped, tag = 'scoped memory for _lambda_.1']
    #allocation4 [shape = 'u8[32768]{0}', space=vmem, size = 0x8000, scoped, tag = 'input window, operand 1, single buffered']
    #allocation5 [shape = 's32[1]{0}', space=sflag, size = 0x4, scoped, tag = 'scoped memory for _lambda_.1']
    #allocation6 [shape = 'u8[512]{0}', space=vmem, size = 0x400, scoped, tag = 'input window, operand 2, single buffered']
    #allocation7 [shape = 'u8[32768]{0}', space=vmem, size = 0x8000, scoped, tag = 'input window, operand 3, single buffered']
    #allocation8 [shape = 's32[1]{0}', space=sflag, size = 0x4, scoped, tag = 'scoped memory for _lambda_.1']
    %10 = vsyncpa [#allocation3], 0
    %11 = vsyncpa [#allocation5], 0
    %12 = vsyncpa [#allocation8], 0
    // Predicated region
    $region2: #{_lambda_.1} parent=1 // pred_check
      _
    $region3: #{_lambda_.1} parent=1 // pred_check_branch
      %14 = sbr.rel (0) target = $region5
    $region4: #{_lambda_.1} parent=1 // pred_region
      %16 = vsyncadd [#allocation3], 0
      %s18 = sshll.u32 %s0, 4
      %s19 = int_to_ptr.hbm [resolvable:$true] %s18
      %s20 = sshll.u32 [#allocation2], 4
      %s21 = int_to_ptr.vmem [resolvable:$true] %s20
      %23 = dma.hbm_to_vmem [thread:$0]  %s19, 128, %s21, [#allocation3]
    $region5: #{_lambda_.1} parent=1 // pred_fallthru
      _
    // Predicated region
    $region6: #{_lambda_.1} parent=1 // pred_check
      _
    $region7: #{_lambda_.1} parent=1 // pred_check_branch
      %25 = sbr.rel (0) target = $region9
    $region8: #{_lambda_.1} parent=1 // pred_region
      %27 = vsyncadd [#allocation5], 0
      %s28 = sshll.u32 %s1, 4
      %s29 = int_to_ptr.hbm [resolvable:$true] %s28
      %s30 = sshll.u32 [#allocation4], 4
      %s31 = int_to_ptr.vmem [resolvable:$true] %s30
      %36 = dma.hbm_to_vmem [thread:$0]  %s29, 1024, %s31, [#allocation5], 64, 64, 4
    $region9: #{_lambda_.1} parent=1 // pred_fallthru
      _
    // Predicated region
    $region10: #{_lambda_.1} parent=1 // pred_check
      _
    $region11: #{_lambda_.1} parent=1 // pred_check_branch
      %38 = sbr.rel (0) target = $region13
    $region12: #{_lambda_.1} parent=1 // pred_region
      %40 = vsyncadd [#allocation5], 0
      %s42 = sshll.u32 %s2, 4
      %s43 = int_to_ptr.hbm [resolvable:$true] %s42
      %s44 = sshll.u32 [#allocation6], 4
      %s45 = int_to_ptr.vmem [resolvable:$true] %s44
      %47 = dma.hbm_to_vmem [thread:$0]  %s43, 16, %s45, [#allocation5]
    $region13: #{_lambda_.1} parent=1 // pred_fallthru
      _
    // Predicated region
    $region14: #{_lambda_.1} parent=1 // pred_check
      _
    $region15: #{_lambda_.1} parent=1 // pred_check_branch
      %49 = sbr.rel (0) target = $region17
    $region16: #{_lambda_.1} parent=1 // pred_region
      %51 = vsyncadd [#allocation8], 0
      %s52 = sshll.u32 %s3, 4
      %s53 = int_to_ptr.hbm [resolvable:$true] %s52
      %s54 = sshll.u32 [#allocation7], 4
      %s55 = int_to_ptr.vmem [resolvable:$true] %s54
      %60 = dma.hbm_to_vmem [thread:$0]  %s53, 1024, %s55, [#allocation8], 64, 64, 4
    $region17: #{_lambda_.1} parent=1 // pred_fallthru
      _
    // Predicated region
    $region18: #{_lambda_.1} parent=1 // pred_check
      _
    $region19: #{_lambda_.1} parent=1 // pred_check_branch
      %62 = sbr.rel (0) target = $region21
    $region20: #{_lambda_.1} parent=1 // pred_region
      _
    $region21: #{_lambda_.1} parent=1 // pred_fallthru
      _
    // Predicated region
    $region22: #{_lambda_.1} parent=1 // pred_check
      _
    $region23: #{_lambda_.1} parent=1 // pred_check_branch
      %64 = sbr.rel (0) target = $region25
    $region24: #{_lambda_.1} parent=1 // pred_region
      %66 = dma.done [#allocation3], 128
    $region25: #{_lambda_.1} parent=1 // pred_fallthru
      _
    // Predicated region
    $region26: #{_lambda_.1} parent=1 // pred_check
      _
    $region27: #{_lambda_.1} parent=1 // pred_check_branch
      %68 = sbr.rel (0) target = $region29
    $region28: #{_lambda_.1} parent=1 // pred_region
      %70 = dma.done [#allocation5], 1024
    $region29: #{_lambda_.1} parent=1 // pred_fallthru
      _
    // Predicated region
    $region30: #{_lambda_.1} parent=1 // pred_check
      _
    $region31: #{_lambda_.1} parent=1 // pred_check_branch
      %72 = sbr.rel (0) target = $region33
    $region32: #{_lambda_.1} parent=1 // pred_region
      %74 = dma.done [#allocation5], 16
    $region33: #{_lambda_.1} parent=1 // pred_fallthru
      _
    // Predicated region
    $region34: #{_lambda_.1} parent=1 // pred_check
      _
    $region35: #{_lambda_.1} parent=1 // pred_check_branch
      %76 = sbr.rel (0) target = $region37
    $region36: #{_lambda_.1} parent=1 // pred_region
      %78 = dma.done [#allocation8], 1024
    $region37: #{_lambda_.1} parent=1 // pred_fallthru
      _
    %v79 = vld [vmem:[#allocation2] sm:$0xff]
    %v80 = vpack.c.bf16 %v79, %v79
    %v81 = vld [vmem:[#allocation4] sm:$0xf]
    %v82 = vld [vmem:[#allocation4 + $0x4] sm:$0xf]
    %v83 = vld [vmem:[#allocation4 + $0x8] sm:$0xf]
    %v84 = vld [vmem:[#allocation4 + $0xc] sm:$0xf]
    %v85 = vld [vmem:[#allocation4 + $0x10] sm:$0xf]
    %v86 = vld [vmem:[#allocation4 + $0x14] sm:$0xf]
    %v87 = vld [vmem:[#allocation4 + $0x18] sm:$0xf]
    %v88 = vld [vmem:[#allocation4 + $0x1c] sm:$0xf]
    %v89 = vld [vmem:[#allocation4 + $0x20] sm:$0xf]
    %v90 = vld [vmem:[#allocation4 + $0x24] sm:$0xf]
    %v91 = vld [vmem:[#allocation4 + $0x28] sm:$0xf]
    %v92 = vld [vmem:[#allocation4 + $0x2c] sm:$0xf]
    %v93 = vld [vmem:[#allocation4 + $0x30] sm:$0xf]
    %v94 = vld [vmem:[#allocation4 + $0x34] sm:$0xf]
    %v95 = vld [vmem:[#allocation4 + $0x38] sm:$0xf]
    %v96 = vld [vmem:[#allocation4 + $0x3c] sm:$0xf]
    %v97 = vld [vmem:[#allocation6] sm:$0x1]
    %v99 = vperm.slane %v97, 0
    %v117 = vunpack.c.l.b16 %v81
    %v118 = vunpack.c.l.b16 %v82
    %v119 = vunpack.c.l.b16 %v83
    %v120 = vunpack.c.l.b16 %v84
    %v121 = vunpack.c.l.b16 %v85
    %v122 = vunpack.c.l.b16 %v86
    %v123 = vunpack.c.l.b16 %v87
    %v124 = vunpack.c.l.b16 %v88
    %v125 = vunpack.c.l.b16 %v89
    %v126 = vunpack.c.l.b16 %v90
    %v127 = vunpack.c.l.b16 %v91
    %v128 = vunpack.c.l.b16 %v92
    %v129 = vunpack.c.l.b16 %v93
    %v130 = vunpack.c.l.b16 %v94
    %v131 = vunpack.c.l.b16 %v95
    %v132 = vunpack.c.l.b16 %v96
    %v133 = vpack.c.b16 %v118, %v117
    %v134 = vpack.c.b16 %v120, %v119
    %v135 = vpack.c.b16 %v122, %v121
    %v136 = vpack.c.b16 %v124, %v123
    %v137 = vpack.c.b16 %v126, %v125
    %v138 = vpack.c.b16 %v128, %v127
    %v139 = vpack.c.b16 %v130, %v129
    %v140 = vpack.c.b16 %v132, %v131
    %149 = vmatpush.bf16.msra.mxu0 %v140
    %150 = vmatpush.bf16.msra.mxu0 %v139
    %151 = vmatpush.bf16.msra.mxu0 %v138
    %152 = vmatpush.bf16.msra.mxu0 %v137
    %153 = vmatpush.bf16.msra.mxu0 %v136
    %154 = vmatpush.bf16.msra.mxu0 %v135
    %155 = vmatpush.bf16.msra.mxu0 %v134
    %156 = vmatpush.bf16.msra.mxu0 %v133
    %157 = vmatmul.bf16.gmra.mxu0 %v80
    %v158 = vpop.f32.mrf.mxu0
    %v159 = vadd.f32 %v99, %v158
    %v160 = vpop.f32.mrf.mxu0
    %161 = vdwg.mxu0
    %v162 = vtanh.pop %v159
    %v163 = vpack.c.bf16 %v162, %v162
    %v164 = vld [vmem:[#allocation7] sm:$0xf]
    %v165 = vld [vmem:[#allocation7 + $0x4] sm:$0xf]
    %v166 = vld [vmem:[#allocation7 + $0x8] sm:$0xf]
    %v167 = vld [vmem:[#allocation7 + $0xc] sm:$0xf]
    %v168 = vld [vmem:[#allocation7 + $0x10] sm:$0xf]
    %v169 = vld [vmem:[#allocation7 + $0x14] sm:$0xf]
    %v170 = vld [vmem:[#allocation7 + $0x18] sm:$0xf]
    %v171 = vld [vmem:[#allocation7 + $0x1c] sm:$0xf]
    %v172 = vld [vmem:[#allocation7 + $0x20] sm:$0xf]
    %v173 = vld [vmem:[#allocation7 + $0x24] sm:$0xf]
    %v174 = vld [vmem:[#allocation7 + $0x28] sm:$0xf]
    %v175 = vld [vmem:[#allocation7 + $0x2c] sm:$0xf]
    %v176 = vld [vmem:[#allocation7 + $0x30] sm:$0xf]
    %v177 = vld [vmem:[#allocation7 + $0x34] sm:$0xf]
    %v178 = vld [vmem:[#allocation7 + $0x38] sm:$0xf]
    %v179 = vld [vmem:[#allocation7 + $0x3c] sm:$0xf]
    %v180 = vld [vmem:[%s4] sm:$0x1]
    %v182 = vperm.slane %v180, 0
    %v200 = vunpack.c.l.b16 %v164
    %v201 = vunpack.c.l.b16 %v165
    %v202 = vunpack.c.l.b16 %v166
    %v203 = vunpack.c.l.b16 %v167
    %v204 = vunpack.c.l.b16 %v168
    %v205 = vunpack.c.l.b16 %v169
    %v206 = vunpack.c.l.b16 %v170
    %v207 = vunpack.c.l.b16 %v171
    %v208 = vunpack.c.l.b16 %v172
    %v209 = vunpack.c.l.b16 %v173
    %v210 = vunpack.c.l.b16 %v174
    %v211 = vunpack.c.l.b16 %v175
    %v212 = vunpack.c.l.b16 %v176
    %v213 = vunpack.c.l.b16 %v177
    %v214 = vunpack.c.l.b16 %v178
    %v215 = vunpack.c.l.b16 %v179
    %v216 = vpack.c.b16 %v201, %v200
    %v217 = vpack.c.b16 %v203, %v202
    %v218 = vpack.c.b16 %v205, %v204
    %v219 = vpack.c.b16 %v207, %v206
    %v220 = vpack.c.b16 %v209, %v208
    %v221 = vpack.c.b16 %v211, %v210
    %v222 = vpack.c.b16 %v213, %v212
    %v223 = vpack.c.b16 %v215, %v214
    %232 = vmatpush.bf16.msra.mxu0 %v223
    %233 = vmatpush.bf16.msra.mxu0 %v222
    %234 = vmatpush.bf16.msra.mxu0 %v221
    %235 = vmatpush.bf16.msra.mxu0 %v220
    %236 = vmatpush.bf16.msra.mxu0 %v219
    %237 = vmatpush.bf16.msra.mxu0 %v218
    %238 = vmatpush.bf16.msra.mxu0 %v217
    %239 = vmatpush.bf16.msra.mxu0 %v216
    %240 = vmatmul.bf16.gmra.mxu0 %v163
    %v241 = vpop.f32.mrf.mxu0
    %v242 = vadd.f32 %v182, %v241
    %v243 = vpop.f32.mrf.mxu0
    %244 = vdwg.mxu0
    %245 = vst [vmem:[%s5] sm:$0xff] %v242
    // Predicated region
    $region38: #{_lambda_.1} parent=1 // pred_check
      _
    $region39: #{_lambda_.1} parent=1 // pred_check_branch
      %247 = sbr.rel (0) target = $region41
    $region40: #{_lambda_.1} parent=1 // pred_region
      _
    $region41: #{_lambda_.1} parent=1 // pred_fallthru
      _
    // Predicated region
    $region42: #{_lambda_.1} parent=1 // pred_check
      _
    $region43: #{_lambda_.1} parent=1 // pred_check_branch
      %249 = sbr.rel (0) target = $region45
    $region44: #{_lambda_.1} parent=1 // pred_region
      _
    $region45: #{_lambda_.1} parent=1 // pred_fallthru
      _
    %250 = vsyncpa [#allocation3], 1
    %251 = vsyncpa [#allocation5], 1
    %252 = vsyncpa [#allocation8], 1

</llo_original>
